<compile_context>
chip_gen: v7x
topology: tpu7x:2x2x1
jax: 0.10.0
libtpu: 0.0.40
codegen_flags: <defaults>
</compile_context>

<pallas_src>
import jax
import jax.numpy as jnp
from jax.experimental import pallas as pl
from jax.experimental.pallas import tpu as pltpu


def _round_up(n, m):
    return ((n + m - 1) // m) * m


def _policy_kernel(x_ref, w1_ref, b1_ref, w2_ref, b2_ref, wm_ref, bm_ref, mean_ref):
    # Three bf16 MXU matmuls with f32 accumulation; bias-add + tanh in f32.
    # Everything lives in VMEM; only the lane-dense mean tile is stored.
    x = x_ref[...]  # bf16 (tb, state)
    h1 = jnp.tanh(
        jnp.dot(x, w1_ref[...], preferred_element_type=jnp.float32) + b1_ref[...]
    )
    h2 = jnp.tanh(
        jnp.dot(h1.astype(jnp.bfloat16), w2_ref[...],
                preferred_element_type=jnp.float32) + b2_ref[...]
    )
    mean_ref[...] = (
        jnp.dot(h2.astype(jnp.bfloat16), wm_ref[...],
                preferred_element_type=jnp.float32) + bm_ref[...]
    )


def prepare_params(raw_params):
    """One-time prep (do NOT run per forward call):
    - pad the mean head to a lane-dense width (multiple of 128 columns),
    - cast weight matrices to bf16 for the MXU, keep biases/log_std in f32."""
    w1, b1, w2, b2, wm, bm, log_std = raw_params
    hidden = w1.shape[1]
    action_size = wm.shape[1]
    ap = _round_up(action_size, 128)
    if ap != action_size:
        wm = jnp.zeros((hidden, ap), wm.dtype).at[:, :action_size].set(wm)
        bm = jnp.zeros((1, ap), bm.dtype).at[:, :action_size].set(bm)
    return (
        w1.astype(jnp.bfloat16), b1.astype(jnp.float32),
        w2.astype(jnp.bfloat16), b2.astype(jnp.float32),
        wm.astype(jnp.bfloat16), bm.astype(jnp.float32),
        log_std.astype(jnp.float32),
    )


def policy_forward(x, prepared, *, batch_tile=2048):
    """x: [B, state_size] float32.  prepared: output of prepare_params.
    Returns (mean [B, action_size] f32, std [B, action_size] f32)."""
    w1, b1, w2, b2, wm, bm, log_std = prepared
    B, state_size = x.shape
    hidden = w1.shape[1]
    ap = wm.shape[1]                  # lane-padded action dim (multiple of 128)
    action_size = log_std.shape[1]    # real action dim

    # --- Batch tiling --------------------------------------------------------
    # Right-size the tile: minimize pad rows, force a multiple of 8 (sublane),
    # and keep >= 2 grid steps for big batches so v7x's 2 TCs both get work.
    min_steps = 2 if B >= 16 else 1
    n_tiles = max(pl.cdiv(B, batch_tile), min_steps)
    tb = _round_up(pl.cdiv(B, n_tiles), 8)
    bp = _round_up(B, tb)
    grid = (bp // tb,)

    x = x.astype(jnp.bfloat16)                       # halve x DMA bytes
    x_p = x if bp == B else jnp.pad(x, ((0, bp - B), (0, 0)))

    # --- Cost estimate (helps XLA overlap neighbouring ops) ------------------
    flops = 2 * bp * (state_size * hidden + hidden * hidden + hidden * ap)
    bytes_accessed = (
        bp * state_size * 2 + bp * ap * 4
        + (w1.size + w2.size + wm.size) * 2
        + (b1.size + b2.size + bm.size) * 4
    )
    cost = pl.CostEstimate(flops=flops, transcendentals=2 * bp * hidden,
                           bytes_accessed=bytes_accessed)

    # --- VMEM budget: only raise the scoped limit if we'd exceed v5e's 16 MiB.
    vmem_bytes = (
        2 * tb * state_size * 2              # x double-buffer (bf16)
        + 2 * tb * ap * 4                    # mean double-buffer (f32)
        + 2 * (w1.size + w2.size + wm.size) * 2
        + 2 * (b1.size + b2.size + bm.size) * 4
    )
    cp_kwargs = dict(dimension_semantics=("parallel",))
    if vmem_bytes > 12 * 1024 * 1024:
        cp_kwargs["vmem_limit_bytes"] = min(2 * vmem_bytes, 64 * 1024 * 1024)

    mean_p = pl.pallas_call(
        _policy_kernel,
        out_shape=jax.ShapeDtypeStruct((bp, ap), jnp.float32),
        grid_spec=pltpu.PrefetchScalarGridSpec(
            num_scalar_prefetch=0,
            grid=grid,
            in_specs=[
                # Batch-tiled activation (pipelined across grid steps).
                pl.BlockSpec((tb, state_size), lambda i: (i, 0)),
                # Weights / biases: constant index_map -> VMEM-resident.
                pl.BlockSpec((state_size, hidden), lambda i: (0, 0)),
                pl.BlockSpec((1, hidden), lambda i: (0, 0)),
                pl.BlockSpec((hidden, hidden), lambda i: (0, 0)),
                pl.BlockSpec((1, hidden), lambda i: (0, 0)),
                pl.BlockSpec((hidden, ap), lambda i: (0, 0)),
                pl.BlockSpec((1, ap), lambda i: (0, 0)),
            ],
            out_specs=pl.BlockSpec((tb, ap), lambda i: (i, 0)),
        ),
        compiler_params=pltpu.CompilerParams(**cp_kwargs),
        cost_estimate=cost,
    )(x_p, w1, b1, w2, b2, wm, bm)

    # NOTE: keep this slice fused with the consumer (jit the whole step);
    # it is materialized here only so the demo can check shapes/values.
    mean = mean_p[:B, :action_size]
    # std depends only on log_std -> tiny XLA op, no kernel writeback.
    std = jnp.broadcast_to(jnp.exp(log_std), (B, action_size))
    return mean, std


def init_params(key, state_size, action_size, hidden=32, log_std_init=0.0):
    """PyTorch-Linear-style init: U(-1/sqrt(fan_in), 1/sqrt(fan_in)).
    Weights stored as (in_features, out_features)."""
    ks = jax.random.split(key, 6)

    def linear(kw, kb, fan_in, fan_out):
        bound = 1.0 / jnp.sqrt(jnp.float32(fan_in))
        w = jax.random.uniform(kw, (fan_in, fan_out), jnp.float32, -bound, bound)
        b = jax.random.uniform(kb, (1, fan_out), jnp.float32, -bound, bound)
        return w, b

    w1, b1 = linear(ks[0], ks[1], state_size, hidden)
    w2, b2 = linear(ks[2], ks[3], hidden, hidden)
    wm, bm = linear(ks[4], ks[5], hidden, action_size)
    log_std = jnp.ones((1, action_size), jnp.float32) * log_std_init
    return (w1, b1, w2, b2, wm, bm, log_std)


def _reference(x, raw_params, emulate_bf16=False):
    w1, b1, w2, b2, wm, bm, log_std = raw_params
    if emulate_bf16:
        def dot(a, b):
            return jnp.dot(a.astype(jnp.bfloat16), b.astype(jnp.bfloat16),
                           preferred_element_type=jnp.float32)
    else:
        def dot(a, b):
            return jnp.dot(a, b, preferred_element_type=jnp.float32)
    h1 = jnp.tanh(dot(x, w1) + b1)
    h2 = jnp.tanh(dot(h1, w2) + b2)
    mean = dot(h2, wm) + bm
    std = jnp.broadcast_to(jnp.exp(log_std), mean.shape)
    return mean, std


if __name__ == "__main__":
    key = jax.random.PRNGKey(0)
    k_x, k_x2, k_p = jax.random.split(key, 3)

    state_size, action_size, hidden = 16, 8, 32
    raw_params = init_params(k_p, state_size, action_size, hidden=hidden)
    params = prepare_params(raw_params)   # one-time pad + bf16 cast

    # --- Small demo batch (matches the module's toy usage). ------------------
    batch = 2
    x = jax.random.normal(k_x, (batch, state_size), jnp.float32)
    mean, std = policy_forward(x, params)
    jax.block_until_ready((mean, std))

    mean_f32, std_ref = _reference(x, raw_params)
    mean_bf16, _ = _reference(x, raw_params, emulate_bf16=True)
    assert mean.shape == (batch, action_size) and std.shape == (batch, action_size)
    assert jnp.allclose(mean, mean_bf16, atol=1e-3, rtol=1e-3)   # kernel arithmetic
    assert jnp.allclose(mean, mean_f32, atol=5e-2, rtol=5e-2)    # f32 semantics
    assert jnp.allclose(std, std_ref, atol=1e-6, rtol=1e-6)

    # --- Multi-tile batch: exercises grid, padding and resident weights. -----
    batch2 = 40  # with batch_tile=16 -> tb=16, 3 grid steps, 8 pad rows
    x2 = jax.random.normal(k_x2, (batch2, state_size), jnp.float32)
    mean2, std2 = policy_forward(x2, params, batch_tile=16)
    jax.block_until_ready((mean2, std2))

    mean2_bf16, std2_ref = _reference(x2, raw_params, emulate_bf16=True)
    mean2_f32, _ = _reference(x2, raw_params)
    assert mean2.shape == (batch2, action_size) and std2.shape == (batch2, action_size)
    assert jnp.allclose(mean2, mean2_bf16, atol=1e-3, rtol=1e-3)
    assert jnp.allclose(mean2, mean2_f32, atol=5e-2, rtol=5e-2)
    assert jnp.allclose(std2, std2_ref, atol=1e-6, rtol=1e-6)

    print("KERNEL_OK")
</pallas_src>

<mosaic_0001>
module attributes {stable_mosaic.version = 11 : i64} {
  func.func @_policy_kernel(%arg0: i32, %arg1: memref<8x16xbf16, #tpu.memory_space<vmem>>, %arg2: memref<16x32xbf16, #tpu.memory_space<vmem>>, %arg3: memref<1x32xf32, #tpu.memory_space<vmem>>, %arg4: memref<32x32xbf16, #tpu.memory_space<vmem>>, %arg5: memref<1x32xf32, #tpu.memory_space<vmem>>, %arg6: memref<32x128xbf16, #tpu.memory_space<vmem>>, %arg7: memref<1x128xf32, #tpu.memory_space<vmem>>, %arg8: memref<8x128xf32, #tpu.memory_space<vmem>>) attributes {dimension_semantics = [#tpu.dimension_semantics<parallel>], iteration_bounds = array<i64: 1>, scalar_prefetch = 0 : i64, scratch_operands = 0 : i64, tpu.core_type = #tpu.core_type<tc>, window_params = [{transform_indices = @transform_0, window_bounds = array<i64: 8, 16>}, {pipeline_mode = #tpu.pipeline_mode<synchronous>, transform_indices = @transform_1, window_bounds = array<i64: 16, 32>}, {pipeline_mode = #tpu.pipeline_mode<synchronous>, transform_indices = @transform_2, window_bounds = array<i64: 1, 32>}, {pipeline_mode = #tpu.pipeline_mode<synchronous>, transform_indices = @transform_3, window_bounds = array<i64: 32, 32>}, {pipeline_mode = #tpu.pipeline_mode<synchronous>, transform_indices = @transform_4, window_bounds = array<i64: 1, 32>}, {pipeline_mode = #tpu.pipeline_mode<synchronous>, transform_indices = @transform_5, window_bounds = array<i64: 32, 128>}, {pipeline_mode = #tpu.pipeline_mode<synchronous>, transform_indices = @transform_6, window_bounds = array<i64: 1, 128>}, {transform_indices = @transform_7, window_bounds = array<i64: 8, 128>}]} {
    %c0 = arith.constant 0 : index
    %c0_0 = arith.constant 0 : index
    %0 = vector.load %arg1[%c0, %c0_0] : memref<8x16xbf16, #tpu.memory_space<vmem>>, vector<8x16xbf16>
    %c0_1 = arith.constant 0 : index
    %c0_2 = arith.constant 0 : index
    %1 = vector.load %arg2[%c0_1, %c0_2] : memref<16x32xbf16, #tpu.memory_space<vmem>>, vector<16x32xbf16>
    %cst = arith.constant dense<0.000000e+00> : vector<8x32xf32>
    %2 = tpu.matmul %0, %1, %cst {dimension_numbers = #tpu.dot_dimension_numbers<[1], [0], [0], [1], [0, 0, 1, 1], [], []>} : vector<8x16xbf16>, vector<16x32xbf16>, vector<8x32xf32> -> vector<8x32xf32>
    %c0_3 = arith.constant 0 : index
    %c0_4 = arith.constant 0 : index
    %3 = vector.load %arg3[%c0_3, %c0_4] : memref<1x32xf32, #tpu.memory_space<vmem>>, vector<1x32xf32>
    %4 = vector.broadcast %3 : vector<1x32xf32> to vector<8x32xf32>
    %5 = arith.addf %2, %4 : vector<8x32xf32>
    %6 = math.tanh %5 : vector<8x32xf32>
    %7 = arith.truncf %6 : vector<8x32xf32> to vector<8x32xbf16>
    %c0_5 = arith.constant 0 : index
    %c0_6 = arith.constant 0 : index
    %8 = vector.load %arg4[%c0_5, %c0_6] : memref<32x32xbf16, #tpu.memory_space<vmem>>, vector<32x32xbf16>
    %cst_7 = arith.constant dense<0.000000e+00> : vector<8x32xf32>
    %9 = tpu.matmul %7, %8, %cst_7 {dimension_numbers = #tpu.dot_dimension_numbers<[1], [0], [0], [1], [0, 0, 1, 1], [], []>} : vector<8x32xbf16>, vector<32x32xbf16>, vector<8x32xf32> -> vector<8x32xf32>
    %c0_8 = arith.constant 0 : index
    %c0_9 = arith.constant 0 : index
    %10 = vector.load %arg5[%c0_8, %c0_9] : memref<1x32xf32, #tpu.memory_space<vmem>>, vector<1x32xf32>
    %11 = vector.broadcast %10 : vector<1x32xf32> to vector<8x32xf32>
    %12 = arith.addf %9, %11 : vector<8x32xf32>
    %13 = math.tanh %12 : vector<8x32xf32>
    %14 = arith.truncf %13 : vector<8x32xf32> to vector<8x32xbf16>
    %c0_10 = arith.constant 0 : index
    %c0_11 = arith.constant 0 : index
    %15 = vector.load %arg6[%c0_10, %c0_11] : memref<32x128xbf16, #tpu.memory_space<vmem>>, vector<32x128xbf16>
    %cst_12 = arith.constant dense<0.000000e+00> : vector<8x128xf32>
    %16 = tpu.matmul %14, %15, %cst_12 {dimension_numbers = #tpu.dot_dimension_numbers<[1], [0], [0], [1], [0, 0, 1, 1], [], []>} : vector<8x32xbf16>, vector<32x128xbf16>, vector<8x128xf32> -> vector<8x128xf32>
    %c0_13 = arith.constant 0 : index
    %c0_14 = arith.constant 0 : index
    %17 = vector.load %arg7[%c0_13, %c0_14] : memref<1x128xf32, #tpu.memory_space<vmem>>, vector<1x128xf32>
    %18 = vector.broadcast %17 : vector<1x128xf32> to vector<8x128xf32>
    %19 = arith.addf %16, %18 : vector<8x128xf32>
    %c0_15 = arith.constant 0 : index
    %c0_16 = arith.constant 0 : index
    %20 = vector.load %arg8[%c0_15, %c0_16] : memref<8x128xf32, #tpu.memory_space<vmem>>, vector<8x128xf32>
    tpu.vector_store %arg8[%c0_15, %c0_16], %19 {strides = array<i32>} : memref<8x128xf32, #tpu.memory_space<vmem>>, vector<8x128xf32>,
    return
  }
  func.func @transform_0(%arg0: i32) -> (i32, i32) {
    %c0_i32 = arith.constant 0 : i32
    %c0_i32_0 = arith.constant 0 : i32
    return %arg0, %c0_i32 : i32, i32
  }
  func.func @transform_1(%arg0: i32) -> (i32, i32) {
    %c0_i32 = arith.constant 0 : i32
    %c0_i32_0 = arith.constant 0 : i32
    %c0_i32_1 = arith.constant 0 : i32
    return %c0_i32, %c0_i32_0 : i32, i32
  }
  func.func @transform_2(%arg0: i32) -> (i32, i32) {
    %c0_i32 = arith.constant 0 : i32
    %c0_i32_0 = arith.constant 0 : i32
    %c0_i32_1 = arith.constant 0 : i32
    return %c0_i32, %c0_i32_0 : i32, i32
  }
  func.func @transform_3(%arg0: i32) -> (i32, i32) {
    %c0_i32 = arith.constant 0 : i32
    %c0_i32_0 = arith.constant 0 : i32
    %c0_i32_1 = arith.constant 0 : i32
    return %c0_i32, %c0_i32_0 : i32, i32
  }
  func.func @transform_4(%arg0: i32) -> (i32, i32) {
    %c0_i32 = arith.constant 0 : i32
    %c0_i32_0 = arith.constant 0 : i32
    %c0_i32_1 = arith.constant 0 : i32
    return %c0_i32, %c0_i32_0 : i32, i32
  }
  func.func @transform_5(%arg0: i32) -> (i32, i32) {
    %c0_i32 = arith.constant 0 : i32
    %c0_i32_0 = arith.constant 0 : i32
    %c0_i32_1 = arith.constant 0 : i32
    return %c0_i32, %c0_i32_0 : i32, i32
  }
  func.func @transform_6(%arg0: i32) -> (i32, i32) {
    %c0_i32 = arith.constant 0 : i32
    %c0_i32_0 = arith.constant 0 : i32
    %c0_i32_1 = arith.constant 0 : i32
    return %c0_i32, %c0_i32_0 : i32, i32
  }
  func.func @transform_7(%arg0: i32) -> (i32, i32) {
    %c0_i32 = arith.constant 0 : i32
    %c0_i32_0 = arith.constant 0 : i32
    return %arg0, %c0_i32 : i32, i32
  }
}

</mosaic_0001>

<llo_original>
// kernel: tpu_custom_call.1
$region0: #{tpu_custom_call.1}
  #allocation0 [shape = 'u32[]', space=smem, size = 0x4, offset = 0x4, fixed_abs, tag = 'smem constant byte address 0x4 - core index']
  #allocation1 [shape = 'u32[144,128]{1,0:T(1,128)}', space=vmem, size = 0x12000, scoped, tag = 'internal scratch']
  %s0 = inlined_call_operand.hbm [shape: bf16[8,16], index: 0, kind: input, shape index: {}]
  %s1 = inlined_call_operand.hbm [shape: bf16[16,32], index: 1, kind: input, shape index: {}]
  %s2 = inlined_call_operand.vmem [shape: f32[1,32], index: 2, kind: input, shape index: {}]
  %s3 = inlined_call_operand.hbm [shape: bf16[32,32], index: 3, kind: input, shape index: {}]
  %s4 = inlined_call_operand.vmem [shape: f32[1,32], index: 4, kind: input, shape index: {}]
  %s5 = inlined_call_operand.vmem [shape: bf16[32,128], index: 5, kind: input, shape index: {}]
  %s6 = inlined_call_operand.vmem [shape: f32[1,128], index: 6, kind: input, shape index: {}]
  %s7 = inlined_call_operand.hbm [shape: f32[8,128], index: 7, kind: output, shape index: {}]
  %s8 = sld [smem:[#allocation0]]
  $region50: #{tpu_custom_call.1} parent=0
    _
  %s10 = ssub.s32 1, %s8
  %s11 = scalar_select 0, %s10, %s8
  $region1: #{tpu_custom_call.1} parent=0
    #allocation2 [shape = 'u8[2048]{0}', space=vmem, size = 0x800, scoped, tag = 'input window, operand 0, single buffered']
    #allocation3 [shape = 's32[1]{0}', space=sflag, size = 0x4, scoped, tag = 'scoped memory for tpu_custom_call.1']
    #allocation4 [shape = 's32[1]{0}', space=sflag, size = 0x4, scoped, tag = 'scoped memory for tpu_custom_call.1']
    #allocation5 [shape = 'u8[4096]{0}', space=vmem, size = 0x1000, scoped, tag = 'input window, operand 1, single buffered']
    #allocation6 [shape = 's32[1]{0}', space=sflag, size = 0x4, scoped, tag = 'scoped memory for tpu_custom_call.1']
    #allocation7 [shape = 'u8[8192]{0}', space=vmem, size = 0x2000, scoped, tag = 'input window, operand 3, single buffered']
    #allocation8 [shape = 'u8[4096]{0}', space=vmem, size = 0x1000, scoped, tag = 'output window, operand 0, single buffered']
    %12 = vsyncpa [#allocation3], 0
    %13 = vsyncpa [#allocation6], 0
    %14 = vsyncpa [#allocation4], 0
    // Predicated region
    $region2: #{tpu_custom_call.1} parent=1 // pred_check
      _
    $region3: #{tpu_custom_call.1} parent=1 // pred_check_branch
      %16 = sbr.rel (0) target = $region5
    $region4: #{tpu_custom_call.1} parent=1 // pred_region
      %s18 = ssub.s32 64, 64
      %19 = vsyncadd [#allocation3], %s18
      %s21 = sshll.u32 [#allocation2], 4
      %s22 = int_to_ptr.vmem [resolvable:$true] %s21
      %24 = dma.hbm_to_vmem [thread:$0]  %s0, 64, %s22, [#allocation3]
    $region5: #{tpu_custom_call.1} parent=1 // pred_fallthru
      _
    // Predicated region
    $region6: #{tpu_custom_call.1} parent=1 // pred_check
      _
    $region7: #{tpu_custom_call.1} parent=1 // pred_check_branch
      %26 = sbr.rel (0) target = $region9
    $region8: #{tpu_custom_call.1} parent=1 // pred_region
      %s28 = ssub.s32 128, 128
      %29 = vsyncadd [#allocation6], %s28
      %s30 = sshll.u32 [#allocation5], 4
      %s31 = int_to_ptr.vmem [resolvable:$true] %s30
      %36 = dma.hbm_to_vmem [thread:$0]  %s1, 128, %s31, [#allocation6], 64, 64, 4
    $region9: #{tpu_custom_call.1} parent=1 // pred_fallthru
      _
    // Predicated region
    $region10: #{tpu_custom_call.1} parent=1 // pred_check
      _
    $region11: #{tpu_custom_call.1} parent=1 // pred_check_branch
      %38 = sbr.rel (0) target = $region13
    $region12: #{tpu_custom_call.1} parent=1 // pred_region
      _
    $region13: #{tpu_custom_call.1} parent=1 // pred_fallthru
      _
    // Predicated region
    $region14: #{tpu_custom_call.1} parent=1 // pred_check
      _
    $region15: #{tpu_custom_call.1} parent=1 // pred_check_branch
      %40 = sbr.rel (0) target = $region17
    $region16: #{tpu_custom_call.1} parent=1 // pred_region
      %s42 = ssub.s32 256, 256
      %43 = vsyncadd [#allocation6], %s42
      %s44 = sshll.u32 [#allocation7], 4
      %s45 = int_to_ptr.vmem [resolvable:$true] %s44
      %50 = dma.hbm_to_vmem [thread:$0]  %s3, 256, %s45, [#allocation6], 64, 64, 4
    $region17: #{tpu_custom_call.1} parent=1 // pred_fallthru
      _
    // Predicated region
    $region18: #{tpu_custom_call.1} parent=1 // pred_check
      _
    $region19: #{tpu_custom_call.1} parent=1 // pred_check_branch
      %52 = sbr.rel (0) target = $region21
    $region20: #{tpu_custom_call.1} parent=1 // pred_region
      _
    $region21: #{tpu_custom_call.1} parent=1 // pred_fallthru
      _
    // Predicated region
    $region22: #{tpu_custom_call.1} parent=1 // pred_check
      _
    $region23: #{tpu_custom_call.1} parent=1 // pred_check_branch
      %54 = sbr.rel (0) target = $region25
    $region24: #{tpu_custom_call.1} parent=1 // pred_region
      _
    $region25: #{tpu_custom_call.1} parent=1 // pred_fallthru
      _
    // Predicated region
    $region26: #{tpu_custom_call.1} parent=1 // pred_check
      _
    $region27: #{tpu_custom_call.1} parent=1 // pred_check_branch
      %56 = sbr.rel (0) target = $region29
    $region28: #{tpu_custom_call.1} parent=1 // pred_region
      _
    $region29: #{tpu_custom_call.1} parent=1 // pred_fallthru
      _
    // Predicated region
    $region30: #{tpu_custom_call.1} parent=1 // pred_check
      _
    $region31: #{tpu_custom_call.1} parent=1 // pred_check_branch
      %58 = sbr.rel (0) target = $region33
    $region32: #{tpu_custom_call.1} parent=1 // pred_region
      %59 = dma.done [#allocation3], 64
    $region33: #{tpu_custom_call.1} parent=1 // pred_fallthru
      _
    // Predicated region
    $region34: #{tpu_custom_call.1} parent=1 // pred_check
      _
    $region35: #{tpu_custom_call.1} parent=1 // pred_check_branch
      %61 = sbr.rel (0) target = $region37
    $region36: #{tpu_custom_call.1} parent=1 // pred_region
      %62 = dma.done [#allocation6], 128
    $region37: #{tpu_custom_call.1} parent=1 // pred_fallthru
      _
    // Predicated region
    $region38: #{tpu_custom_call.1} parent=1 // pred_check
      _
    $region39: #{tpu_custom_call.1} parent=1 // pred_check_branch
      %64 = sbr.rel (0) target = $region41
    $region40: #{tpu_custom_call.1} parent=1 // pred_region
      %65 = dma.done [#allocation6], 256
    $region41: #{tpu_custom_call.1} parent=1 // pred_fallthru
      _
    %v67 = vld [vmem:[#allocation2] sm:$0xf]
    %v68 = vld [vmem:[#allocation5] sm:$0xf]
    %v69 = vld [vmem:[#allocation5 + $0x4] sm:$0xf]
    %v70 = vld [vmem:[%s2] sm:$0x1]
    %v72 = vlaneseq
    %v73 = vshrl.u32 %v72, 7
    %v74 = vsub.s32 0, %v73
    %v75 = vrot.slane %v70, %v74
    %v79 = vunpack.c.l.b16 %v68
    %v80 = vunpack.c.l.b16 %v69
    %v81 = vpack.c.b16 %v80, %v79
    %vm83 = vcmask 130048
    %v85 = vsel %vm83, %v67, 0
    %87 = vmatprep.subr.bf16.mxu0 0
    %88 = vmatpush1.bf16.msra.mxu0 %v81
    %89 = vmatprep.subr.bf16.mxu0 0
    %90 = vmatpush1.bf16.msra.mxu0 0
    %91 = vmatprep.subr.bf16.mxu0 0
    %92 = vmatpush1.bf16.msra.mxu0 0
    %93 = vmatprep.subr.bf16.mxu0 0
    %94 = vmatpush1.bf16.msra.mxu0 0
    %95 = vmatprep.subr.bf16.mxu0 0
    %96 = vmatpush1.bf16.msra.mxu0 0
    %97 = vmatprep.subr.bf16.mxu0 0
    %98 = vmatpush1.bf16.msra.mxu0 0
    %99 = vmatprep.subr.bf16.mxu0 0
    %100 = vmatpush1.bf16.msra.mxu0 0
    %101 = vmatprep.subr.bf16.mxu0 0
    %102 = vmatpush1.bf16.msra.mxu0 0
    %103 = vmatprep.subr.bf16.mxu0 0
    %104 = vmatpush1.bf16.msra.mxu0 0
    %105 = vmatprep.subr.bf16.mxu0 0
    %106 = vmatpush1.bf16.msra.mxu0 0
    %107 = vmatprep.subr.bf16.mxu0 0
    %108 = vmatpush1.bf16.msra.mxu0 0
    %109 = vmatprep.subr.bf16.mxu0 0
    %110 = vmatpush1.bf16.msra.mxu0 0
    %111 = vmatprep.subr.bf16.mxu0 0
    %112 = vmatpush1.bf16.msra.mxu0 0
    %113 = vmatprep.subr.bf16.mxu0 0
    %114 = vmatpush1.bf16.msra.mxu0 0
    %115 = vmatprep.subr.bf16.mxu0 0
    %116 = vmatpush1.bf16.msra.mxu0 0
    %117 = vmatprep.subr.bf16.mxu0 0
    %118 = vmatpush1.bf16.msra.mxu0 0
    %119 = vmatprep.mubr.bf16.mxu0 0
    %120 = vmatmul.mubr.bf16.gmra.mrb[0].mxu0 %v85
    %v121 = vpop.f32.mrb[0].mxu0
    %v122 = vadd.f32 %v75, %v121
    %v123 = vpop.f32.mrb[0].mxu0
    %v124 = vpop.f32.mrb[0].mxu0
    %v125 = vpop.f32.mrb[0].mxu0
    %126 = vdwg.mxu0
    %v127 = vtanh.pop %v122
    %v128 = vpack.c.bf16 %v127, %v127
    %v129 = vld [vmem:[#allocation7] sm:$0xf]
    %v130 = vld [vmem:[#allocation7 + $0x4] sm:$0xf]
    %v131 = vld [vmem:[#allocation7 + $0x8] sm:$0xf]
    %v132 = vld [vmem:[#allocation7 + $0xc] sm:$0xf]
    %v133 = vld [vmem:[%s4] sm:$0x1]
    %v135 = vlaneseq
    %v136 = vshrl.u32 %v135, 7
    %v137 = vsub.s32 0, %v136
    %v138 = vrot.slane %v133, %v137
    %v144 = vunpack.c.l.b16 %v129
    %v145 = vunpack.c.l.b16 %v130
    %v146 = vunpack.c.l.b16 %v131
    %v147 = vunpack.c.l.b16 %v132
    %v148 = vpack.c.b16 %v145, %v144
    %v149 = vpack.c.b16 %v147, %v146
    %vm152 = vcmask 261120
    %v154 = vsel %vm152, %v128, 0
    %156 = vmatprep.subr.bf16.mxu0 0
    %157 = vmatpush1.bf16.msra.mxu0 %v148
    %158 = vmatprep.subr.bf16.mxu0 0
    %159 = vmatpush1.bf16.msra.mxu0 %v149
    %160 = vmatprep.subr.bf16.mxu0 0
    %161 = vmatpush1.bf16.msra.mxu0 0
    %162 = vmatprep.subr.bf16.mxu0 0
    %163 = vmatpush1.bf16.msra.mxu0 0
    %164 = vmatprep.subr.bf16.mxu0 0
    %165 = vmatpush1.bf16.msra.mxu0 0
    %166 = vmatprep.subr.bf16.mxu0 0
    %167 = vmatpush1.bf16.msra.mxu0 0
    %168 = vmatprep.subr.bf16.mxu0 0
    %169 = vmatpush1.bf16.msra.mxu0 0
    %170 = vmatprep.subr.bf16.mxu0 0
    %171 = vmatpush1.bf16.msra.mxu0 0
    %172 = vmatprep.subr.bf16.mxu0 0
    %173 = vmatpush1.bf16.msra.mxu0 0
    %174 = vmatprep.subr.bf16.mxu0 0
    %175 = vmatpush1.bf16.msra.mxu0 0
    %176 = vmatprep.subr.bf16.mxu0 0
    %177 = vmatpush1.bf16.msra.mxu0 0
    %178 = vmatprep.subr.bf16.mxu0 0
    %179 = vmatpush1.bf16.msra.mxu0 0
    %180 = vmatprep.subr.bf16.mxu0 0
    %181 = vmatpush1.bf16.msra.mxu0 0
    %182 = vmatprep.subr.bf16.mxu0 0
    %183 = vmatpush1.bf16.msra.mxu0 0
    %184 = vmatprep.subr.bf16.mxu0 0
    %185 = vmatpush1.bf16.msra.mxu0 0
    %186 = vmatprep.subr.bf16.mxu0 0
    %187 = vmatpush1.bf16.msra.mxu0 0
    %188 = vmatprep.mubr.bf16.mxu0 0
    %189 = vmatmul.mubr.bf16.gmra.mrb[0].mxu0 %v154
    %v190 = vpop.f32.mrb[0].mxu0
    %v191 = vadd.f32 %v138, %v190
    %v192 = vpop.f32.mrb[0].mxu0
    %v193 = vpop.f32.mrb[0].mxu0
    %v194 = vpop.f32.mrb[0].mxu0
    %195 = vdwg.mxu0
    %v196 = vtanh.pop %v191
    %v197 = vpack.c.bf16 %v196, %v196
    %v198 = vld [vmem:[%s5] sm:$0xf]
    %v199 = vld [vmem:[%s5 + $0x4] sm:$0xf]
    %v200 = vld [vmem:[%s5 + $0x8] sm:$0xf]
    %v201 = vld [vmem:[%s5 + $0xc] sm:$0xf]
    %v202 = vld [vmem:[%s6] sm:$0x1]
    %v204 = vlaneseq
    %v205 = vshrl.u32 %v204, 7
    %v206 = vsub.s32 0, %v205
    %v207 = vrot.slane %v202, %v206
    %v213 = vunpack.c.l.b16 %v198
    %v214 = vunpack.c.l.b16 %v199
    %v215 = vunpack.c.l.b16 %v200
    %v216 = vunpack.c.l.b16 %v201
    %v217 = vpack.c.b16 %v214, %v213
    %v218 = vpack.c.b16 %v216, %v215
    %v222 = vsel %vm152, %v197, 0
    %224 = vmatprep.subr.bf16.mxu0 0
    %225 = vmatpush1.bf16.msra.mxu0 %v217
    %226 = vmatprep.subr.bf16.mxu0 0
    %227 = vmatpush1.bf16.msra.mxu0 %v218
    %228 = vmatprep.subr.bf16.mxu0 0
    %229 = vmatpush1.bf16.msra.mxu0 0
    %230 = vmatprep.subr.bf16.mxu0 0
    %231 = vmatpush1.bf16.msra.mxu0 0
    %232 = vmatprep.subr.bf16.mxu0 0
    %233 = vmatpush1.bf16.msra.mxu0 0
    %234 = vmatprep.subr.bf16.mxu0 0
    %235 = vmatpush1.bf16.msra.mxu0 0
    %236 = vmatprep.subr.bf16.mxu0 0
    %237 = vmatpush1.bf16.msra.mxu0 0
    %238 = vmatprep.subr.bf16.mxu0 0
    %239 = vmatpush1.bf16.msra.mxu0 0
    %240 = vmatprep.subr.bf16.mxu0 0
    %241 = vmatpush1.bf16.msra.mxu0 0
    %242 = vmatprep.subr.bf16.mxu0 0
    %243 = vmatpush1.bf16.msra.mxu0 0
    %244 = vmatprep.subr.bf16.mxu0 0
    %245 = vmatpush1.bf16.msra.mxu0 0
    %246 = vmatprep.subr.bf16.mxu0 0
    %247 = vmatpush1.bf16.msra.mxu0 0
    %248 = vmatprep.subr.bf16.mxu0 0
    %249 = vmatpush1.bf16.msra.mxu0 0
    %250 = vmatprep.subr.bf16.mxu0 0
    %251 = vmatpush1.bf16.msra.mxu0 0
    %252 = vmatprep.subr.bf16.mxu0 0
    %253 = vmatpush1.bf16.msra.mxu0 0
    %254 = vmatprep.subr.bf16.mxu0 0
    %255 = vmatpush1.bf16.msra.mxu0 0
    %256 = vmatprep.mubr.bf16.mxu0 0
    %257 = vmatmul.mubr.bf16.gmra.mrb[0].mxu0 %v222
    %v258 = vpop.f32.mrb[0].mxu0
    %v259 = vadd.f32 %v207, %v258
    %v260 = vpop.f32.mrb[0].mxu0
    %v261 = vpop.f32.mrb[0].mxu0
    %v262 = vpop.f32.mrb[0].mxu0
    %263 = vdwg.mxu0
    %264 = vst [vmem:[#allocation8] sm:$0xff] %v259
    // Predicated region
    $region42: #{tpu_custom_call.1} parent=1 // pred_check
      _
    $region43: #{tpu_custom_call.1} parent=1 // pred_check_branch
      %266 = sbr.rel (0) target = $region45
    $region44: #{tpu_custom_call.1} parent=1 // pred_region
      %s268 = ssub.s32 128, 128
      %269 = vsyncadd [#allocation4], %s268
      %s271 = sshll.u32 [#allocation8], 4
      %s272 = int_to_ptr.vmem [resolvable:$true] %s271
      %274 = dma.vmem_to_hbm [thread:$0]  %s272, 128, %s7, [#allocation4]
    $region45: #{tpu_custom_call.1} parent=1 // pred_fallthru
      _
    // Predicated region
    $region46: #{tpu_custom_call.1} parent=1 // pred_check
      _
    $region47: #{tpu_custom_call.1} parent=1 // pred_check_branch
      %276 = sbr.rel (0) target = $region49
    $region48: #{tpu_custom_call.1} parent=1 // pred_region
      %277 = dma.done [#allocation4], 128
    $region49: #{tpu_custom_call.1} parent=1 // pred_fallthru
      _
    %278 = vsyncpa [#allocation3], 1
    %279 = vsyncpa [#allocation6], 1
    %280 = vsyncpa [#allocation4], 1

</llo_original>
